<compile_context>
chip_gen: v6e
topology: v6e:2x2x1
jax: 0.10.0
libtpu: 0.0.40
codegen_flags: <defaults>
</compile_context>

<pallas_src>
import functools

import jax
import jax.numpy as jnp
from jax.experimental import pallas as pl
from jax.experimental.pallas import tpu as pltpu

GEM_EPS = 1e-6   # GeneralizedMeanPoolingP eps
BN_EPS = 1e-5    # BatchNorm2d eps


def _round_up(x, m):
    return (x + m - 1) // m * m


def _pow_p(y, p):
    """y ** p with a VPU multiply chain for small integer p (no EUP exp/log)."""
    if float(p) == int(p) and int(p) >= 1:
        ip = int(p)
        out = y
        for _ in range(ip - 1):
            out = out * y
        return out
    return jnp.exp(p * jnp.log(y))


def _pick_col_block(ac_pad, col_block):
    """Largest multiple of 128 <= col_block that divides ac_pad (or ac_pad)."""
    if ac_pad <= col_block:
        return ac_pad
    cb = (col_block // 128) * 128
    while cb > 128 and ac_pad % cb != 0:
        cb -= 128
    return cb if (cb >= 128 and ac_pad % cb == 0) else ac_pad


def bap_kernel(feat_ref, attn_ref, w_ref, expd_ref, shift_ref, out_ref, *,
               p, hw, hw_pad):
    # feat_ref  : (B, THW, C_in)   bf16 spatial tile of features (channels-last)
    # attn_ref  : (B, THW, A)      bf16 attention maps for this tile
    # w_ref     : (C_in, NC)       bf16 stacked 1x1-conv weights * BN scale
    # expd_ref  : (A, NC)          bf16 block-diagonal attention expander
    # shift_ref : (1, NC)          f32 folded BN shift
    # out_ref   : (B, NC)          f32 GeM accumulator / final pooled output
    t = pl.program_id(1)
    nt = pl.num_programs(1)

    B, THW, C_in = feat_ref.shape
    A = attn_ref.shape[-1]
    NC = w_ref.shape[-1]

    @pl.when(t == 0)
    def _():
        out_ref[...] = jnp.zeros_like(out_ref)

    # One wide MXU matmul for all heads (BN scale already folded into w).
    x = feat_ref[...].reshape(B * THW, C_in)                       # bf16
    z = jnp.dot(x, w_ref[...], preferred_element_type=jnp.float32)  # (B*THW, NC)

    # Attention broadcast across each head's C_out lanes via a tiny MXU matmul
    # against the constant block-diagonal expander (exact: 1.0 * att + 0s).
    a = attn_ref[...].reshape(B * THW, A)                          # bf16
    att = jnp.dot(a, expd_ref[...], preferred_element_type=jnp.float32)

    # Post-conv attention + folded BN shift (scale already inside w).
    y = z * att + shift_ref[...]                                   # f32

    # GeM: clamp(min=eps) ** p, spatial sum (mean + root finalized at the end).
    y = jnp.maximum(y, GEM_EPS)
    y_p = _pow_p(y, p)

    out_ref[...] += jnp.sum(y_p.reshape(B, THW, NC), axis=1)       # (B, NC)

    @pl.when(t == nt - 1)
    def _():
        acc = out_ref[...]
        if hw_pad != hw:  # static: traced only when spatial padding exists
            # Zero-padded feat rows give z == 0, hence y == shift exactly;
            # subtract their closed-form contribution once (no per-tile mask).
            pad_p = _pow_p(jnp.maximum(shift_ref[...], GEM_EPS), p)
            acc = acc - float(hw_pad - hw) * pad_p
        m = acc * (1.0 / hw)                                        # spatial mean
        out_ref[...] = jnp.exp(jnp.log(m) * (1.0 / p))              # m ** (1/p)


def bap_forward(attentions, features, weights, bn_gamma, bn_beta,
                bn_mean, bn_var, p, *, block_hw=512, col_block=512):
    """attentions: (B, A, H, W), features: (B, C_in, H, W) -- NCHW like PyTorch.

    weights: (A, C_in, C_out) stacked per-head 1x1-conv weights.
    bn_*:    (A, C_out) per-head BatchNorm2d inference statistics/affine.
    """
    B, A, H, W = attentions.shape
    C_in = features.shape[1]
    C_out = weights.shape[-1]
    AC = A * C_out
    HW = H * W

    # Channels-last, spatially flattened, MXU-friendly dtypes.
    feat = jnp.transpose(features, (0, 2, 3, 1)).reshape(B, HW, C_in)
    feat = feat.astype(jnp.bfloat16)
    attn = jnp.transpose(attentions, (0, 2, 3, 1)).reshape(B, HW, A)
    attn = attn.astype(jnp.bfloat16)

    # Fold BN (inference) into the stacked weights (f32 fold, bf16 cast last).
    inv_std = 1.0 / jnp.sqrt(bn_var + BN_EPS)                      # (A, C_out)
    scale = bn_gamma * inv_std
    shift = bn_beta - bn_mean * scale
    w_scaled = weights * scale[:, None, :]                         # (A, C_in, C_out) f32
    # Column a*C_out + c  <->  head a, channel c.
    w_all = jnp.transpose(w_scaled, (1, 0, 2)).reshape(C_in, AC).astype(jnp.bfloat16)
    shift_all = shift.reshape(1, AC).astype(jnp.float32)

    # Block-diagonal attention expander: expander[a, a*C_out + c] = 1.
    expander = jnp.repeat(jnp.eye(A, dtype=jnp.bfloat16), C_out, axis=1)  # (A, AC)

    # Lane-dense output columns: pad AC to a multiple of 128, slice off after.
    AC_pad = _round_up(AC, 128)
    if AC_pad != AC:
        w_all = jnp.pad(w_all, ((0, 0), (0, AC_pad - AC)))
        shift_all = jnp.pad(shift_all, ((0, 0), (0, AC_pad - AC)))
        expander = jnp.pad(expander, ((0, 0), (0, AC_pad - AC)))
    cb = _pick_col_block(AC_pad, col_block)
    n_cols = AC_pad // cb

    # Tile HW as the (last) reduction axis; feat is zero-padded so the pad
    # contribution can be removed in closed form inside the kernel.
    thw = min(block_hw, _round_up(HW, 8))
    hw_pad = _round_up(HW, thw)
    if hw_pad != HW:
        feat = jnp.pad(feat, ((0, 0), (0, hw_pad - HW), (0, 0)))
        attn = jnp.pad(attn, ((0, 0), (0, hw_pad - HW), (0, 0)))
    n_tiles = hw_pad // thw

    # Per-shape VMEM estimate (double-buffered operands + live f32 temporaries),
    # capped at 64 MiB so the same limit is valid on v5e/v6e/v7x.
    est_bytes = (2 * B * thw * C_in * 2 + 2 * B * thw * A * 2
                 + 2 * C_in * cb * 2 + 2 * A * cb * 2 + 2 * cb * 4
                 + 2 * B * cb * 4 + 4 * B * thw * cb * 4)
    vmem_limit = int(min(max(2 * est_bytes, 32 * 1024 * 1024), 64 * 1024 * 1024))

    kernel = functools.partial(bap_kernel, p=float(p), hw=HW, hw_pad=hw_pad)

    pooled = pl.pallas_call(
        kernel,
        out_shape=jax.ShapeDtypeStruct((B, AC_pad), jnp.float32),
        grid_spec=pltpu.PrefetchScalarGridSpec(
            num_scalar_prefetch=0,
            grid=(n_cols, n_tiles),            # parallel cols, arbitrary HW
            in_specs=[
                pl.BlockSpec((B, thw, C_in), lambda j, t: (0, t, 0)),
                pl.BlockSpec((B, thw, A), lambda j, t: (0, t, 0)),
                # Grid-invariant along t; Mosaic skips re-fetching unchanged
                # block indices.  (pl.Buffered(1) could also pin single-buffer.)
                pl.BlockSpec((C_in, cb), lambda j, t: (0, j)),
                pl.BlockSpec((A, cb), lambda j, t: (0, j)),
                pl.BlockSpec((1, cb), lambda j, t: (0, j)),
            ],
            out_specs=pl.BlockSpec((B, cb), lambda j, t: (0, j)),
        ),
        compiler_params=pltpu.CompilerParams(
            dimension_semantics=("parallel", "arbitrary"),
            vmem_limit_bytes=vmem_limit),
    )(feat, attn, w_all, expander, shift_all)

    pooled = pooled[:, :AC]
    aif_features = [pooled[:, i * C_out:(i + 1) * C_out] for i in range(A)]
    bap_features = jax.nn.relu(pooled)   # no-op (GeM output > 0); kept for spec fidelity
    return aif_features, bap_features


def bap_reference(attentions, features, weights, bn_gamma, bn_beta,
                  bn_mean, bn_var, p):
    """Pure-JAX reference (emulates the kernel's bf16 MXU inputs)."""
    B, A, H, W = attentions.shape
    HW = H * W
    feat = jnp.transpose(features, (0, 2, 3, 1)).reshape(B, HW, -1)
    feat = feat.astype(jnp.bfloat16).astype(jnp.float32)
    attn = jnp.transpose(attentions, (0, 2, 3, 1)).reshape(B, HW, A)
    attn = attn.astype(jnp.bfloat16).astype(jnp.float32)
    inv_std = 1.0 / jnp.sqrt(bn_var + BN_EPS)
    scale = bn_gamma * inv_std
    shift = bn_beta - bn_mean * scale
    w_scaled = (weights * scale[:, None, :]).astype(jnp.bfloat16).astype(jnp.float32)
    pooled = []
    for a in range(A):
        z = jnp.einsum('bsc,cd->bsd', feat, w_scaled[a])
        y = z * attn[:, :, a:a + 1] + shift[a]
        y = jnp.maximum(y, GEM_EPS) ** p
        m = jnp.mean(y, axis=1)
        pooled.append(m ** (1.0 / p))
    cat = jnp.concatenate(pooled, axis=1)
    return pooled, jax.nn.relu(cat)


if __name__ == "__main__":
    # Small shapes consistent with the module's forward.  HW=100 with
    # block_hw=32 exercises multi-tile accumulation AND the pad correction;
    # AC=256 with col_block=128 exercises the parallel column axis.
    B, C_in, C_out, A, H, W = 2, 32, 64, 4, 10, 10

    key = jax.random.PRNGKey(0)
    k_feat, k_attn, k_w, k_g, k_b = jax.random.split(key, 5)

    features = jax.random.normal(k_feat, (B, C_in, H, W), jnp.float32)
    attentions = jax.nn.sigmoid(
        jax.random.normal(k_attn, (B, A, H, W), jnp.float32))

    # Deterministic "kaiming-like" init for the per-head 1x1 conv weights.
    weights = jax.random.normal(k_w, (A, C_in, C_out), jnp.float32) * (2.0 / C_in) ** 0.5
    bn_gamma = 1.0 + 0.1 * jax.random.normal(k_g, (A, C_out), jnp.float32)
    bn_beta = 0.1 * jax.random.normal(k_b, (A, C_out), jnp.float32)
    bn_mean = jnp.zeros((A, C_out), jnp.float32)
    bn_var = jnp.ones((A, C_out), jnp.float32)
    p = 3.0  # GeneralizedMeanPoolingP init

    aif_features, bap_features = bap_forward(
        attentions, features, weights, bn_gamma, bn_beta, bn_mean, bn_var, p,
        block_hw=32, col_block=128)
    jax.block_until_ready(bap_features)
    for f in aif_features:
        jax.block_until_ready(f)

    # Validate against the pure-JAX reference (bf16 matmul -> loose tolerance).
    ref_aif, ref_bap = bap_reference(
        attentions, features, weights, bn_gamma, bn_beta, bn_mean, bn_var, p)
    assert bap_features.shape == (B, A * C_out)
    assert all(f.shape == (B, C_out) for f in aif_features)
    assert jnp.allclose(bap_features, ref_bap, rtol=1e-2, atol=1e-3), (
        "bap_features mismatch vs reference")
    for got, want in zip(aif_features, ref_aif):
        assert jnp.allclose(got, want, rtol=1e-2, atol=1e-3), (
            "aif_features mismatch vs reference")

    print("KERNEL_OK")
</pallas_src>

<mosaic_0001>
module attributes {stable_mosaic.version = 11 : i64} {
  func.func @bap_kernel(%arg0: i32, %arg1: i32, %arg2: memref<2x32x32xbf16, #tpu.memory_space<vmem>>, %arg3: memref<2x32x4xbf16, #tpu.memory_space<vmem>>, %arg4: memref<32x128xbf16, #tpu.memory_space<vmem>>, %arg5: memref<4x128xbf16, #tpu.memory_space<vmem>>, %arg6: memref<1x128xf32, #tpu.memory_space<vmem>>, %arg7: memref<2x128xf32, #tpu.memory_space<vmem>>) attributes {dimension_semantics = [#tpu.dimension_semantics<parallel>, #tpu.dimension_semantics<arbitrary>], iteration_bounds = array<i64: 2, 4>, scalar_prefetch = 0 : i64, scratch_operands = 0 : i64, tpu.core_type = #tpu.core_type<tc>, window_params = [{transform_indices = @transform_0, window_bounds = array<i64: 2, 32, 32>}, {transform_indices = @transform_1, window_bounds = array<i64: 2, 32, 4>}, {transform_indices = @transform_2, window_bounds = array<i64: 32, 128>}, {transform_indices = @transform_3, window_bounds = array<i64: 4, 128>}, {transform_indices = @transform_4, window_bounds = array<i64: 1, 128>}, {transform_indices = @transform_5, window_bounds = array<i64: 2, 128>}]} {
    %c0_i32 = arith.constant 0 : i32
    %0 = arith.cmpi eq, %arg1, %c0_i32 : i32
    %1 = arith.extui %0 : i1 to i32
    %c0_i32_0 = arith.constant 0 : i32
    %2 = arith.cmpi ne, %1, %c0_i32_0 : i32
    scf.if %2 {
      %cst_20 = arith.constant 0.000000e+00 : f32
      %27 = vector.broadcast %cst_20 : f32 to vector<2x128xf32>
      %c0_21 = arith.constant 0 : index
      %c0_22 = arith.constant 0 : index
      %28 = vector.load %arg7[%c0_21, %c0_22] : memref<2x128xf32, #tpu.memory_space<vmem>>, vector<2x128xf32>
      tpu.vector_store %arg7[%c0_21, %c0_22], %27 {strides = array<i32>} : memref<2x128xf32, #tpu.memory_space<vmem>>, vector<2x128xf32>,
    } else {
    }
    %c0 = arith.constant 0 : index
    %c0_1 = arith.constant 0 : index
    %c0_2 = arith.constant 0 : index
    %3 = vector.load %arg2[%c0, %c0_1, %c0_2] : memref<2x32x32xbf16, #tpu.memory_space<vmem>>, vector<2x32x32xbf16>
    %4 = vector.shape_cast %3 : vector<2x32x32xbf16> to vector<64x32xbf16>
    %c0_3 = arith.constant 0 : index
    %c0_4 = arith.constant 0 : index
    %5 = vector.load %arg4[%c0_3, %c0_4] : memref<32x128xbf16, #tpu.memory_space<vmem>>, vector<32x128xbf16>
    %cst = arith.constant dense<0.000000e+00> : vector<64x128xf32>
    %6 = tpu.matmul %4, %5, %cst {dimension_numbers = #tpu.dot_dimension_numbers<[1], [0], [0], [1], [0, 0, 1, 1], [], []>} : vector<64x32xbf16>, vector<32x128xbf16>, vector<64x128xf32> -> vector<64x128xf32>
    %c0_5 = arith.constant 0 : index
    %c0_6 = arith.constant 0 : index
    %c0_7 = arith.constant 0 : index
    %7 = vector.load %arg3[%c0_5, %c0_6, %c0_7] : memref<2x32x4xbf16, #tpu.memory_space<vmem>>, vector<2x32x4xbf16>
    %8 = vector.shape_cast %7 : vector<2x32x4xbf16> to vector<64x4xbf16>
    %c0_8 = arith.constant 0 : index
    %c0_9 = arith.constant 0 : index
    %9 = vector.load %arg5[%c0_8, %c0_9] : memref<4x128xbf16, #tpu.memory_space<vmem>>, vector<4x128xbf16>
    %cst_10 = arith.constant dense<0.000000e+00> : vector<64x128xf32>
    %10 = tpu.matmul %8, %9, %cst_10 {dimension_numbers = #tpu.dot_dimension_numbers<[1], [0], [0], [1], [0, 0, 1, 1], [], []>} : vector<64x4xbf16>, vector<4x128xbf16>, vector<64x128xf32> -> vector<64x128xf32>
    %11 = arith.mulf %6, %10 : vector<64x128xf32>
    %c0_11 = arith.constant 0 : index
    %c0_12 = arith.constant 0 : index
    %12 = vector.load %arg6[%c0_11, %c0_12] : memref<1x128xf32, #tpu.memory_space<vmem>>, vector<1x128xf32>
    %13 = vector.broadcast %12 : vector<1x128xf32> to vector<64x128xf32>
    %14 = arith.addf %11, %13 : vector<64x128xf32>
    %cst_13 = arith.constant 9.99999997E-7 : f32
    %15 = vector.broadcast %cst_13 : f32 to vector<64x128xf32>
    %16 = arith.maximumf %14, %15 : vector<64x128xf32>
    %17 = arith.mulf %16, %16 : vector<64x128xf32>
    %18 = arith.mulf %17, %16 : vector<64x128xf32>
    %c0_14 = arith.constant 0 : index
    %c0_15 = arith.constant 0 : index
    %19 = vector.load %arg7[%c0_14, %c0_15] : memref<2x128xf32, #tpu.memory_space<vmem>>, vector<2x128xf32>
    %20 = vector.shape_cast %18 : vector<64x128xf32> to vector<2x32x128xf32>
    %cst_16 = arith.constant dense<0.000000e+00> : vector<2x128xf32>
    %21 = vector.multi_reduction <add>, %20, %cst_16 [1] : vector<2x32x128xf32> to vector<2x128xf32>
    %22 = arith.addf %19, %21 : vector<2x128xf32>
    %c0_17 = arith.constant 0 : index
    %c0_18 = arith.constant 0 : index
    %23 = vector.load %arg7[%c0_17, %c0_18] : memref<2x128xf32, #tpu.memory_space<vmem>>, vector<2x128xf32>
    tpu.vector_store %arg7[%c0_17, %c0_18], %22 {strides = array<i32>} : memref<2x128xf32, #tpu.memory_space<vmem>>, vector<2x128xf32>,
    %c3_i32 = arith.constant 3 : i32
    %24 = arith.cmpi eq, %arg1, %c3_i32 : i32
    %25 = arith.extui %24 : i1 to i32
    %c0_i32_19 = arith.constant 0 : i32
    %26 = arith.cmpi ne, %25, %c0_i32_19 : i32
    scf.if %26 {
      %c0_20 = arith.constant 0 : index
      %c0_21 = arith.constant 0 : index
      %27 = vector.load %arg7[%c0_20, %c0_21] : memref<2x128xf32, #tpu.memory_space<vmem>>, vector<2x128xf32>
      %c0_22 = arith.constant 0 : index
      %c0_23 = arith.constant 0 : index
      %28 = vector.load %arg6[%c0_22, %c0_23] : memref<1x128xf32, #tpu.memory_space<vmem>>, vector<1x128xf32>
      %cst_24 = arith.constant 9.99999997E-7 : f32
      %29 = vector.broadcast %cst_24 : f32 to vector<1x128xf32>
      %30 = arith.maximumf %28, %29 : vector<1x128xf32>
      %31 = arith.mulf %30, %30 : vector<1x128xf32>
      %32 = arith.mulf %31, %30 : vector<1x128xf32>
      %cst_25 = arith.constant 2.800000e+01 : f32
      %33 = vector.broadcast %cst_25 : f32 to vector<1x128xf32>
      %34 = arith.mulf %33, %32 : vector<1x128xf32>
      %35 = vector.broadcast %34 : vector<1x128xf32> to vector<2x128xf32>
      %36 = arith.subf %27, %35 : vector<2x128xf32>
      %cst_26 = arith.constant 0.00999999977 : f32
      %37 = vector.broadcast %cst_26 : f32 to vector<2x128xf32>
      %38 = arith.mulf %36, %37 : vector<2x128xf32>
      %39 = math.log %38 : vector<2x128xf32>
      %cst_27 = arith.constant 0.333333343 : f32
      %40 = vector.broadcast %cst_27 : f32 to vector<2x128xf32>
      %41 = arith.mulf %39, %40 : vector<2x128xf32>
      %42 = math.exp %41 : vector<2x128xf32>
      %c0_28 = arith.constant 0 : index
      %c0_29 = arith.constant 0 : index
      %43 = vector.load %arg7[%c0_28, %c0_29] : memref<2x128xf32, #tpu.memory_space<vmem>>, vector<2x128xf32>
      tpu.vector_store %arg7[%c0_28, %c0_29], %42 {strides = array<i32>} : memref<2x128xf32, #tpu.memory_space<vmem>>, vector<2x128xf32>,
    } else {
    }
    return
  }
  func.func @transform_0(%arg0: i32, %arg1: i32) -> (i32, i32, i32) {
    %c0_i32 = arith.constant 0 : i32
    %c0_i32_0 = arith.constant 0 : i32
    %c0_i32_1 = arith.constant 0 : i32
    return %c0_i32, %arg1, %c0_i32_0 : i32, i32, i32
  }
  func.func @transform_1(%arg0: i32, %arg1: i32) -> (i32, i32, i32) {
    %c0_i32 = arith.constant 0 : i32
    %c0_i32_0 = arith.constant 0 : i32
    %c0_i32_1 = arith.constant 0 : i32
    return %c0_i32, %arg1, %c0_i32_0 : i32, i32, i32
  }
  func.func @transform_2(%arg0: i32, %arg1: i32) -> (i32, i32) {
    %c0_i32 = arith.constant 0 : i32
    %c0_i32_0 = arith.constant 0 : i32
    return %c0_i32, %arg0 : i32, i32
  }
  func.func @transform_3(%arg0: i32, %arg1: i32) -> (i32, i32) {
    %c0_i32 = arith.constant 0 : i32
    %c0_i32_0 = arith.constant 0 : i32
    return %c0_i32, %arg0 : i32, i32
  }
  func.func @transform_4(%arg0: i32, %arg1: i32) -> (i32, i32) {
    %c0_i32 = arith.constant 0 : i32
    %c0_i32_0 = arith.constant 0 : i32
    return %c0_i32, %arg0 : i32, i32
  }
  func.func @transform_5(%arg0: i32, %arg1: i32) -> (i32, i32) {
    %c0_i32 = arith.constant 0 : i32
    %c0_i32_0 = arith.constant 0 : i32
    return %c0_i32, %arg0 : i32, i32
  }
}

</mosaic_0001>

<llo_original>
// kernel: tpu_custom_call.1
$region0: #{tpu_custom_call.1}
  #allocation0 [shape = 'u32[]', space=smem, size = 0x4, offset = 0x4, fixed_abs, tag = 'smem constant byte address 0x4 - core index']
  #allocation1 [shape = 'u32[144,128]{1,0:T(1,128)}', space=vmem, size = 0x12000, scoped, tag = 'internal scratch']
  %s0 = inlined_call_operand.vmem [shape: bf16[2,128,32], index: 0, kind: input, shape index: {}]
  %s1 = inlined_call_operand.vmem [shape: bf16[2,128,4], index: 1, kind: input, shape index: {}]
  %s2 = inlined_call_operand.vmem [shape: bf16[32,256], index: 2, kind: input, shape index: {}]
  %s3 = inlined_call_operand.vmem [shape: bf16[4,256], index: 3, kind: input, shape index: {}]
  %s4 = inlined_call_operand.vmem [shape: f32[1,256], index: 4, kind: input, shape index: {}]
  %s5 = inlined_call_operand.hbm [shape: f32[2,256], index: 5, kind: output, shape index: {}]
  %s6 = sld [smem:[#allocation0]]
  $region184: #{tpu_custom_call.1} parent=0
    _
  %s8 = ssub.s32 1, %s6
  %s9 = scalar_select 0, %s8, %s6
  $region1: #{tpu_custom_call.1} parent=0
    #allocation2 [shape = 'u8[32768]{0}', space=vmem, size = 0x8000, scoped, tag = 'input window, operand 0']
    #allocation3 [shape = 'u8[32768]{0}', space=vmem, size = 0x8000, scoped, tag = 'input window, operand 1']
    #allocation4 [shape = 'u8[16384]{0}', space=vmem, size = 0x4000, scoped, tag = 'input window, operand 2']
    #allocation5 [shape = 'u8[2048]{0}', space=vmem, size = 0x800, scoped, tag = 'output window, operand 0']
    #allocation6 [shape = 's32[2]{0}', space=sflag, size = 0x8, scoped, tag = 'scoped memory for tpu_custom_call.1']
    %10 = vsyncpa [#allocation6], 0
    %s11 = scalar_lea.sflag [#allocation6], 1
    %12 = vsyncpa %s11, 0
    loop: start=0, step=1, limit=10
    $region2: #{tpu_custom_call.1} parent=1 // loop_pre_header
      _
    $region3: #{tpu_custom_call.1} parent=1 // loop_header
      %s14 = sphi 0, %s18
      %p15 = scmp.ge.s32.totalorder %s14, 10
      %s21 = sphi 0, %s33
      %s22 = sphi 0, %s29
      %s23 = sphi 0, %s21
      %s24 = sphi 0, %s22
      %s25 = sphi 0, %s23
      %s26 = sphi 0, %s24
      %s36 = sphi 0, %s38
      %s39 = sphi 0, %s36
      %s40 = sphi 0, %s39
      %s56 = sphi 0, %s40
      %s62 = sphi 0, %s64
      %s65 = sphi 0, %s62
      %s66 = sphi 0, %s65
      %s82 = sphi 0, %s66
      %s88 = sphi 0, %s90
      %s91 = sphi 0, %s88
      %s92 = sphi 0, %s91
      %s108 = sphi 0, %s92
      %s114 = sphi 0, %s116
      %s117 = sphi 0, %s114
      %s118 = sphi 0, %s117
      %s134 = sphi 0, %s118
      %s140 = sphi 0, %s142
      %s143 = sphi 0, %s140
      %s144 = sphi 0, %s143
      %s160 = sphi 0, %s144
      %s166 = sphi 0, %s168
      %s169 = sphi 0, %s166
      %s170 = sphi 0, %s169
      %s186 = sphi 0, %s170
    $region4: #{tpu_custom_call.1} parent=1 // loop_header_branch
      %17 = sbr.rel (%p15) target = $region8
    $region5: #{tpu_custom_call.1} parent=1 // loop_body
      %s19 = ssub.s32 %s14, 1
      %s20 = ssub.s32 %s14, 2
      %s27 = sadd.s32 1, %s22
      %p28 = scmp.ge.s32.totalorder %s27, 4
      %s29 = scalar_select %p28, 0, %s27
      %s30 = sadd.s32 1, %s21
      %s31 = scalar_select %p28, %s30, %s21
      %p32 = scmp.ge.s32.totalorder %s31, 2
      %s33 = scalar_select %p32, 0, %s31
      %s34 = ssub.s32 %s22, %s29
      %p35 = scmp.eq.s32.totalorder %s34, 0
      %s37 = sadd.s32 %s36, 1
      %s38 = scalar_select %p35, %s36, %s37
      %p41 = pneg %p35
      %p42 = scmp.eq.s32.totalorder %s14, 7
      %p43 = por %p41, %p42
      %p44 = scmp.ne.s32.totalorder %s36, %s39
      %p45 = scmp.eq.s32.totalorder %s14, 0
      %p46 = por %p44, %p45
      %p47 = scmp.ne.s32.totalorder %s36, %s39
      %p48 = scmp.eq.s32.totalorder %s19, 7
      %p49 = por %p47, %p48
      %p50 = scmp.ne.s32.totalorder %s39, %s40
      %p51 = scmp.eq.s32.totalorder %s19, 0
      %p52 = por %p50, %p51
      %p53 = scmp.ne.s32.totalorder %s39, %s40
      %p54 = scmp.eq.s32.totalorder %s20, 7
      %p55 = por %p53, %p54
      %p57 = scmp.ne.s32.totalorder %s40, %s56
      %p58 = scmp.eq.s32.totalorder %s20, 0
      %p59 = por %p57, %p58
      %s60 = ssub.s32 %s22, %s29
      %p61 = scmp.eq.s32.totalorder %s60, 0
      %s63 = sadd.s32 %s62, 1
      %s64 = scalar_select %p61, %s62, %s63
      %p67 = pneg %p61
      %p68 = scmp.eq.s32.totalorder %s14, 7
      %p69 = por %p67, %p68
      %p70 = scmp.ne.s32.totalorder %s62, %s65
      %p71 = scmp.eq.s32.totalorder %s14, 0
      %p72 = por %p70, %p71
      %p73 = scmp.ne.s32.totalorder %s62, %s65
      %p74 = scmp.eq.s32.totalorder %s19, 7
      %p75 = por %p73, %p74
      %p76 = scmp.ne.s32.totalorder %s65, %s66
      %p77 = scmp.eq.s32.totalorder %s19, 0
      %p78 = por %p76, %p77
      %p79 = scmp.ne.s32.totalorder %s65, %s66
      %p80 = scmp.eq.s32.totalorder %s20, 7
      %p81 = por %p79, %p80
      %p83 = scmp.ne.s32.totalorder %s66, %s82
      %p84 = scmp.eq.s32.totalorder %s20, 0
      %p85 = por %p83, %p84
      %s86 = ssub.s32 %s21, %s33
      %p87 = scmp.eq.s32.totalorder %s86, 0
      %s89 = sadd.s32 %s88, 1
      %s90 = scalar_select %p87, %s88, %s89
      %p93 = pneg %p87
      %p94 = scmp.eq.s32.totalorder %s14, 7
      %p95 = por %p93, %p94
      %p96 = scmp.ne.s32.totalorder %s88, %s91
      %p97 = scmp.eq.s32.totalorder %s14, 0
      %p98 = por %p96, %p97
      %p99 = scmp.ne.s32.totalorder %s88, %s91
      %p100 = scmp.eq.s32.totalorder %s19, 7
      %p101 = por %p99, %p100
      %p102 = scmp.ne.s32.totalorder %s91, %s92
      %p103 = scmp.eq.s32.totalorder %s19, 0
      %p104 = por %p102, %p103
      %p105 = scmp.ne.s32.totalorder %s91, %s92
      %p106 = scmp.eq.s32.totalorder %s20, 7
      %p107 = por %p105, %p106
      %p109 = scmp.ne.s32.totalorder %s92, %s108
      %p110 = scmp.eq.s32.totalorder %s20, 0
      %p111 = por %p109, %p110
      %s112 = ssub.s32 %s21, %s33
      %p113 = scmp.eq.s32.totalorder %s112, 0
      %s115 = sadd.s32 %s114, 1
      %s116 = scalar_select %p113, %s114, %s115
      %p119 = pneg %p113
      %p120 = scmp.eq.s32.totalorder %s14, 7
      %p121 = por %p119, %p120
      %p122 = scmp.ne.s32.totalorder %s114, %s117
      %p123 = scmp.eq.s32.totalorder %s14, 0
      %p124 = por %p122, %p123
      %p125 = scmp.ne.s32.totalorder %s114, %s117
      %p126 = scmp.eq.s32.totalorder %s19, 7
      %p127 = por %p125, %p126
      %p128 = scmp.ne.s32.totalorder %s117, %s118
      %p129 = scmp.eq.s32.totalorder %s19, 0
      %p130 = por %p128, %p129
      %p131 = scmp.ne.s32.totalorder %s117, %s118
      %p132 = scmp.eq.s32.totalorder %s20, 7
      %p133 = por %p131, %p132
      %p135 = scmp.ne.s32.totalorder %s118, %s134
      %p136 = scmp.eq.s32.totalorder %s20, 0
      %p137 = por %p135, %p136
      %s138 = ssub.s32 %s21, %s33
      %p139 = scmp.eq.s32.totalorder %s138, 0
      %s141 = sadd.s32 %s140, 1
      %s142 = scalar_select %p139, %s140, %s141
      %p145 = pneg %p139
      %p146 = scmp.eq.s32.totalorder %s14, 7
      %p147 = por %p145, %p146
      %p148 = scmp.ne.s32.totalorder %s140, %s143
      %p149 = scmp.eq.s32.totalorder %s14, 0
      %p150 = por %p148, %p149
      %p151 = scmp.ne.s32.totalorder %s140, %s143
      %p152 = scmp.eq.s32.totalorder %s19, 7
      %p153 = por %p151, %p152
      %p154 = scmp.ne.s32.totalorder %s143, %s144
      %p155 = scmp.eq.s32.totalorder %s19, 0
      %p156 = por %p154, %p155
      %p157 = scmp.ne.s32.totalorder %s143, %s144
      %p158 = scmp.eq.s32.totalorder %s20, 7
      %p159 = por %p157, %p158
      %p161 = scmp.ne.s32.totalorder %s144, %s160
      %p162 = scmp.eq.s32.totalorder %s20, 0
      %p163 = por %p161, %p162
      %s164 = ssub.s32 %s21, %s33
      %p165 = scmp.eq.s32.totalorder %s164, 0
      %s167 = sadd.s32 %s166, 1
      %s168 = scalar_select %p165, %s166, %s167
      %p171 = pneg %p165
      %p172 = scmp.eq.s32.totalorder %s14, 7
      %p173 = por %p171, %p172
      %p174 = scmp.ne.s32.totalorder %s166, %s169
      %p175 = scmp.eq.s32.totalorder %s14, 0
      %p176 = por %p174, %p175
      %p177 = scmp.ne.s32.totalorder %s166, %s169
      %p178 = scmp.eq.s32.totalorder %s19, 7
      %p179 = por %p177, %p178
      %p180 = scmp.ne.s32.totalorder %s169, %s170
      %p181 = scmp.eq.s32.totalorder %s19, 0
      %p182 = por %p180, %p181
      %p183 = scmp.ne.s32.totalorder %s169, %s170
      %p184 = scmp.eq.s32.totalorder %s20, 7
      %p185 = por %p183, %p184
      %p187 = scmp.ne.s32.totalorder %s170, %s186
      %p188 = scmp.eq.s32.totalorder %s20, 0
      %p189 = por %p187, %p188
      %p190 = scmp.le.s32.totalorder 1, %s14
      %p191 = scmp.lt.s32.totalorder %s14, 9
      %p192 = pnand %p190, %p191
      %p193 = pneg %p192
      // Predicated region
      $region9: #{tpu_custom_call.1} parent=5 // pred_check
        _
      $region10: #{tpu_custom_call.1} parent=5 // pred_check_branch
        %195 = sbr.rel (%p192) target = $region12
      $region11: #{tpu_custom_call.1} parent=5 // pred_region
        %s196 = ssub.s32 %s14, 1
      $region12: #{tpu_custom_call.1} parent=5 // pred_fallthru
        _
      %p197 = scmp.lt.s32.totalorder %s14, 8
      // Predicated region
      $region13: #{tpu_custom_call.1} parent=5 // pred_check
        %p198 = pneg %p197
      $region14: #{tpu_custom_call.1} parent=5 // pred_check_branch
        %200 = sbr.rel (%p198) target = $region16
      $region15: #{tpu_custom_call.1} parent=5 // pred_region
        // Predicated region
        $region17: #{tpu_custom_call.1} parent=15 // pred_check
          %p201 = pneg %p46
        $region18: #{tpu_custom_call.1} parent=15 // pred_check_branch
          %203 = sbr.rel (%p201) target = $region20
        $region19: #{tpu_custom_call.1} parent=15 // pred_region
          %s204 = sand.u32 %s36, 1
          %s205 = sand.u32 %s36, 1
          %s206 = smul.addr %s205, 32
          %s207 = scalar_lea.vmem [#allocation2], %s206
          %s208 = smul.u32 4, %s22
          %s209 = smul.addr %s208, 4
          %s210 = scalar_lea.vmem %s0, %s209
          // Predicated region
          $region21: #{tpu_custom_call.1} parent=19 // pred_check
            _
          $region22: #{tpu_custom_call.1} parent=19 // pred_check_branch
            %212 = sbr.rel (0) target = $region24
          $region23: #{tpu_custom_call.1} parent=19 // pred_region
            // Predicated region
            $region25: #{tpu_custom_call.1} parent=23 // pred_check
              _
            $region26: #{tpu_custom_call.1} parent=23 // pred_check_branch
              %214 = sbr.rel target = $region28
            $region27: #{tpu_custom_call.1} parent=23 // pred_region
              // Predicated region
              $region40: #{tpu_custom_call.1} parent=27 // pred_check
                _
              $region41: #{tpu_custom_call.1} parent=27 // pred_check_branch
                %244 = sbr.rel (0) target = $region43
              $region42: #{tpu_custom_call.1} parent=27 // pred_region
                loop: start=0, step=1, limit=1
                $region44: #{tpu_custom_call.1} parent=42 // loop_pre_header
                  _
                $region45: #{tpu_custom_call.1} parent=42 // loop_header
                  %s246 = sphi 0, %s250
                  %p247 = scmp.ge.s32.totalorder %s246, 1
                  %s251 = sphi %s210, %s210
                  %s252 = sphi %s207, %s207
                $region46: #{tpu_custom_call.1} parent=42 // loop_header_branch
                  %249 = sbr.rel (%p247) target = $region50
                $region47: #{tpu_custom_call.1} parent=42 // loop_body
                  _
                $region48: #{tpu_custom_call.1} parent=42 // loop_footer
                  %s250 = sadd.s32 1, %s246
                $region49: #{tpu_custom_call.1} parent=42 // loop_footer_branch
                  %245 = sbr.rel target = $region45
                $region50: #{tpu_custom_call.1} parent=42 // loop_exit
                  _
                %s254 = ssub.s32 16, 1
                loop: start=0, step=1, limit=1
                $region51: #{tpu_custom_call.1} parent=42 // loop_pre_header
                  _
                $region52: #{tpu_custom_call.1} parent=42 // loop_header
                  %s256 = sphi 0, %s260
                  %p257 = scmp.ge.s32.totalorder %s256, 1
                  %s261 = sphi %s210, %s210
                  %s262 = sphi %s207, %s207
                $region53: #{tpu_custom_call.1} parent=42 // loop_header_branch
                  %259 = sbr.rel (%p257) target = $region57
                $region54: #{tpu_custom_call.1} parent=42 // loop_body
                  %v263 = vld [vmem:[%s261] sm:%s254]
                  %264 = vst [vmem:[%s262] sm:%s254] %v263
                  %v265 = vld [vmem:[%s261 + $0x4] sm:%s254]
                  %266 = vst [vmem:[%s262 + $0x4] sm:%s254] %v265
                  %v267 = vld [vmem:[%s261 + $0x8] sm:%s254]
                  %268 = vst [vmem:[%s262 + $0x8] sm:%s254] %v267
                  %v269 = vld [vmem:[%s261 + $0xc] sm:%s254]
                  %270 = vst [vmem:[%s262 + $0xc] sm:%s254] %v269
                  %v271 = vld [vmem:[%s261 + $0x40] sm:%s254]
                  %272 = vst [vmem:[%s262 + $0x10] sm:%s254] %v271
                  %v273 = vld [vmem:[%s261 + $0x44] sm:%s254]
                  %274 = vst [vmem:[%s262 + $0x14] sm:%s254] %v273
                  %v275 = vld [vmem:[%s261 + $0x48] sm:%s254]
                  %276 = vst [vmem:[%s262 + $0x18] sm:%s254] %v275
                  %v277 = vld [vmem:[%s261 + $0x4c] sm:%s254]
                  %278 = vst [vmem:[%s262 + $0x1c] sm:%s254] %v277
                $region55: #{tpu_custom_call.1} parent=42 // loop_footer
                  %s260 = sadd.s32 1, %s256
                $region56: #{tpu_custom_call.1} parent=42 // loop_footer_branch
                  %255 = sbr.rel target = $region52
                $region57: #{tpu_custom_call.1} parent=42 // loop_exit
                  _
              $region43: #{tpu_custom_call.1} parent=27 // pred_fallthru
                _
            $region28: #{tpu_custom_call.1} parent=23 // pred_fallthru
              _
            // Predicated region
            $region29: #{tpu_custom_call.1} parent=23 // pred_check
              _
            $region30: #{tpu_custom_call.1} parent=23 // pred_check_branch
              %216 = sbr.rel (0) target = $region32
            $region31: #{tpu_custom_call.1} parent=23 // pred_region
              %s218 = ssub.s32 16, 1
              loop: start=0, step=1, limit=1
              $region33: #{tpu_custom_call.1} parent=31 // loop_pre_header
                _
              $region34: #{tpu_custom_call.1} parent=31 // loop_header
                %s220 = sphi 0, %s224
                %p221 = scmp.ge.s32.totalorder %s220, 1
                %s225 = sphi %s210, %s210
                %s226 = sphi %s207, %s207
              $region35: #{tpu_custom_call.1} parent=31 // loop_header_branch
                %223 = sbr.rel (%p221) target = $region39
              $region36: #{tpu_custom_call.1} parent=31 // loop_body
                %v227 = vld [vmem:[%s225] sm:%s218]
                %228 = vst [vmem:[%s226] sm:%s218] %v227
                %v229 = vld [vmem:[%s225 + $0x4] sm:%s218]
                %230 = vst [vmem:[%s226 + $0x4] sm:%s218] %v229
                %v231 = vld [vmem:[%s225 + $0x8] sm:%s218]
                %232 = vst [vmem:[%s226 + $0x8] sm:%s218] %v231
                %v233 = vld [vmem:[%s225 + $0xc] sm:%s218]
                %234 = vst [vmem:[%s226 + $0xc] sm:%s218] %v233
                %v235 = vld [vmem:[%s225 + $0x40] sm:%s218]
                %236 = vst [vmem:[%s226 + $0x10] sm:%s218] %v235
                %v237 = vld [vmem:[%s225 + $0x44] sm:%s218]
                %238 = vst [vmem:[%s226 + $0x14] sm:%s218] %v237
                %v239 = vld [vmem:[%s225 + $0x48] sm:%s218]
                %240 = vst [vmem:[%s226 + $0x18] sm:%s218] %v239
                %v241 = vld [vmem:[%s225 + $0x4c] sm:%s218]
                %242 = vst [vmem:[%s226 + $0x1c] sm:%s218] %v241
              $region37: #{tpu_custom_call.1} parent=31 // loop_footer
                %s224 = sadd.s32 1, %s220
              $region38: #{tpu_custom_call.1} parent=31 // loop_footer_branch
                %219 = sbr.rel target = $region34
              $region39: #{tpu_custom_call.1} parent=31 // loop_exit
                _
            $region32: #{tpu_custom_call.1} parent=23 // pred_fallthru
              _
          $region24: #{tpu_custom_call.1} parent=19 // pred_fallthru
            _
          %279 = vnop
        $region20: #{tpu_custom_call.1} parent=15 // pred_fallthru
          _
        // Predicated region
        $region58: #{tpu_custom_call.1} parent=15 // pred_check
          %p280 = pneg %p72
        $region59: #{tpu_custom_call.1} parent=15 // pred_check_branch
          %282 = sbr.rel (%p280) target = $region61
        $region60: #{tpu_custom_call.1} parent=15 // pred_region
          %s283 = sand.u32 %s62, 1
          %s284 = sand.u32 %s62, 1
          %s285 = smul.addr %s284, 32
          %s286 = scalar_lea.vmem [#allocation3], %s285
          %s287 = smul.u32 4, %s22
          %s288 = smul.addr %s287, 4
          %s289 = scalar_lea.vmem %s1, %s288
          // Predicated region
          $region62: #{tpu_custom_call.1} parent=60 // pred_check
            _
          $region63: #{tpu_custom_call.1} parent=60 // pred_check_branch
            %291 = sbr.rel (0) target = $region65
          $region64: #{tpu_custom_call.1} parent=60 // pred_region
            // Predicated region
            $region66: #{tpu_custom_call.1} parent=64 // pred_check
              _
            $region67: #{tpu_custom_call.1} parent=64 // pred_check_branch
              %293 = sbr.rel target = $region69
            $region68: #{tpu_custom_call.1} parent=64 // pred_region
              // Predicated region
              $region81: #{tpu_custom_call.1} parent=68 // pred_check
                _
              $region82: #{tpu_custom_call.1} parent=68 // pred_check_branch
                %323 = sbr.rel (0) target = $region84
              $region83: #{tpu_custom_call.1} parent=68 // pred_region
                loop: start=0, step=1, limit=1
                $region85: #{tpu_custom_call.1} parent=83 // loop_pre_header
                  _
                $region86: #{tpu_custom_call.1} parent=83 // loop_header
                  %s325 = sphi 0, %s329
                  %p326 = scmp.ge.s32.totalorder %s325, 1
                  %s330 = sphi %s289, %s289
                  %s331 = sphi %s286, %s286
                $region87: #{tpu_custom_call.1} parent=83 // loop_header_branch
                  %328 = sbr.rel (%p326) target = $region91
                $region88: #{tpu_custom_call.1} parent=83 // loop_body
                  _
                $region89: #{tpu_custom_call.1} parent=83 // loop_footer
                  %s329 = sadd.s32 1, %s325
                $region90: #{tpu_custom_call.1} parent=83 // loop_footer_branch
                  %324 = sbr.rel target = $region86
                $region91: #{tpu_custom_call.1} parent=83 // loop_exit
                  _
                %s333 = ssub.s32 16, 1
                loop: start=0, step=1, limit=1
                $region92: #{tpu_custom_call.1} parent=83 // loop_pre_header
                  _
                $region93: #{tpu_custom_call.1} parent=83 // loop_header
                  %s335 = sphi 0, %s339
                  %p336 = scmp.ge.s32.totalorder %s335, 1
                  %s340 = sphi %s289, %s289
                  %s341 = sphi %s286, %s286
                $region94: #{tpu_custom_call.1} parent=83 // loop_header_branch
                  %338 = sbr.rel (%p336) target = $region98
                $region95: #{tpu_custom_call.1} parent=83 // loop_body
                  %v342 = vld [vmem:[%s340] sm:%s333]
                  %343 = vst [vmem:[%s341] sm:%s333] %v342
                  %v344 = vld [vmem:[%s340 + $0x4] sm:%s333]
                  %345 = vst [vmem:[%s341 + $0x4] sm:%s333] %v344
                  %v346 = vld [vmem:[%s340 + $0x8] sm:%s333]
                  %347 = vst [vmem:[%s341 + $0x8] sm:%s333] %v346
                  %v348 = vld [vmem:[%s340 + $0xc] sm:%s333]
                  %349 = vst [vmem:[%s341 + $0xc] sm:%s333] %v348
                  %v350 = vld [vmem:[%s340 + $0x40] sm:%s333]
                  %351 = vst [vmem:[%s341 + $0x10] sm:%s333] %v350
                  %v352 = vld [vmem:[%s340 + $0x44] sm:%s333]
                  %353 = vst [vmem:[%s341 + $0x14] sm:%s333] %v352
                  %v354 = vld [vmem:[%s340 + $0x48] sm:%s333]
                  %355 = vst [vmem:[%s341 + $0x18] sm:%s333] %v354
                  %v356 = vld [vmem:[%s340 + $0x4c] sm:%s333]
                  %357 = vst [vmem:[%s341 + $0x1c] sm:%s333] %v356
                $region96: #{tpu_custom_call.1} parent=83 // loop_footer
                  %s339 = sadd.s32 1, %s335
                $region97: #{tpu_custom_call.1} parent=83 // loop_footer_branch
                  %334 = sbr.rel target = $region93
                $region98: #{tpu_custom_call.1} parent=83 // loop_exit
                  _
              $region84: #{tpu_custom_call.1} parent=68 // pred_fallthru
                _
            $region69: #{tpu_custom_call.1} parent=64 // pred_fallthru
              _
            // Predicated region
            $region70: #{tpu_custom_call.1} parent=64 // pred_check
              _
            $region71: #{tpu_custom_call.1} parent=64 // pred_check_branch
              %295 = sbr.rel (0) target = $region73
            $region72: #{tpu_custom_call.1} parent=64 // pred_region
              %s297 = ssub.s32 16, 1
              loop: start=0, step=1, limit=1
              $region74: #{tpu_custom_call.1} parent=72 // loop_pre_header
                _
              $region75: #{tpu_custom_call.1} parent=72 // loop_header
                %s299 = sphi 0, %s303
                %p300 = scmp.ge.s32.totalorder %s299, 1
                %s304 = sphi %s289, %s289
                %s305 = sphi %s286, %s286
              $region76: #{tpu_custom_call.1} parent=72 // loop_header_branch
                %302 = sbr.rel (%p300) target = $region80
              $region77: #{tpu_custom_call.1} parent=72 // loop_body
                %v306 = vld [vmem:[%s304] sm:%s297]
                %307 = vst [vmem:[%s305] sm:%s297] %v306
                %v308 = vld [vmem:[%s304 + $0x4] sm:%s297]
                %309 = vst [vmem:[%s305 + $0x4] sm:%s297] %v308
                %v310 = vld [vmem:[%s304 + $0x8] sm:%s297]
                %311 = vst [vmem:[%s305 + $0x8] sm:%s297] %v310
                %v312 = vld [vmem:[%s304 + $0xc] sm:%s297]
                %313 = vst [vmem:[%s305 + $0xc] sm:%s297] %v312
                %v314 = vld [vmem:[%s304 + $0x40] sm:%s297]
                %315 = vst [vmem:[%s305 + $0x10] sm:%s297] %v314
                %v316 = vld [vmem:[%s304 + $0x44] sm:%s297]
                %317 = vst [vmem:[%s305 + $0x14] sm:%s297] %v316
                %v318 = vld [vmem:[%s304 + $0x48] sm:%s297]
                %319 = vst [vmem:[%s305 + $0x18] sm:%s297] %v318
                %v320 = vld [vmem:[%s304 + $0x4c] sm:%s297]
                %321 = vst [vmem:[%s305 + $0x1c] sm:%s297] %v320
              $region78: #{tpu_custom_call.1} parent=72 // loop_footer
                %s303 = sadd.s32 1, %s299
              $region79: #{tpu_custom_call.1} parent=72 // loop_footer_branch
                %298 = sbr.rel target = $region75
              $region80: #{tpu_custom_call.1} parent=72 // loop_exit
                _
            $region73: #{tpu_custom_call.1} parent=64 // pred_fallthru
              _
          $region65: #{tpu_custom_call.1} parent=60 // pred_fallthru
            _
          %358 = vnop
        $region61: #{tpu_custom_call.1} parent=15 // pred_fallthru
          _
        // Predicated region
        $region99: #{tpu_custom_call.1} parent=15 // pred_check
          %p359 = pneg %p98
        $region100: #{tpu_custom_call.1} parent=15 // pred_check_branch
          %361 = sbr.rel (%p359) target = $region102
        $region101: #{tpu_custom_call.1} parent=15 // pred_region
          %s362 = sand.u32 %s88, 1
          %s363 = sand.u32 %s88, 1
          %s364 = smul.addr %s363, 16
          %s365 = scalar_lea.vmem [#allocation4], %s364
          %s366 = smul.addr %s21, 4
          %s367 = scalar_lea.vmem %s2, %s366
          // Predicated region
          $region103: #{tpu_custom_call.1} parent=101 // pred_check
            _
          $region104: #{tpu_custom_call.1} parent=101 // pred_check_branch
            %369 = sbr.rel (0) target = $region106
          $region105: #{tpu_custom_call.1} parent=101 // pred_region
            // Predicated region
            $region107: #{tpu_custom_call.1} parent=105 // pred_check
              _
            $region108: #{tpu_custom_call.1} parent=105 // pred_check_branch
              %371 = sbr.rel target = $region110
            $region109: #{tpu_custom_call.1} parent=105 // pred_region
              // Predicated region
              $region122: #{tpu_custom_call.1} parent=109 // pred_check
                _
              $region123: #{tpu_custom_call.1} parent=109 // pred_check_branch
                %393 = sbr.rel (0) target = $region125
              $region124: #{tpu_custom_call.1} parent=109 // pred_region
                loop: start=0, step=1, limit=1
                $region126: #{tpu_custom_call.1} parent=124 // loop_pre_header
                  _
                $region127: #{tpu_custom_call.1} parent=124 // loop_header
                  %s395 = sphi 0, %s399
                  %p396 = scmp.ge.s32.totalorder %s395, 1
                  %s400 = sphi %s367, %s367
                  %s401 = sphi %s365, %s365
                $region128: #{tpu_custom_call.1} parent=124 // loop_header_branch
                  %398 = sbr.rel (%p396) target = $region132
                $region129: #{tpu_custom_call.1} parent=124 // loop_body
                  _
                $region130: #{tpu_custom_call.1} parent=124 // loop_footer
                  %s399 = sadd.s32 1, %s395
                $region131: #{tpu_custom_call.1} parent=124 // loop_footer_branch
                  %394 = sbr.rel target = $region127
                $region132: #{tpu_custom_call.1} parent=124 // loop_exit
                  _
                %s403 = ssub.s32 16, 1
                loop: start=0, step=1, limit=1
                $region133: #{tpu_custom_call.1} parent=124 // loop_pre_header
                  _
                $region134: #{tpu_custom_call.1} parent=124 // loop_header
                  %s405 = sphi 0, %s409
                  %p406 = scmp.ge.s32.totalorder %s405, 1
                  %s410 = sphi %s367, %s367
                  %s411 = sphi %s365, %s365
                $region135: #{tpu_custom_call.1} parent=124 // loop_header_branch
                  %408 = sbr.rel (%p406) target = $region139
                $region136: #{tpu_custom_call.1} parent=124 // loop_body
                  %v412 = vld [vmem:[%s410] sm:%s403]
                  %413 = vst [vmem:[%s411] sm:%s403] %v412
                  %v414 = vld [vmem:[%s410 + $0x8] sm:%s403]
                  %415 = vst [vmem:[%s411 + $0x4] sm:%s403] %v414
                  %v416 = vld [vmem:[%s410 + $0x10] sm:%s403]
                  %417 = vst [vmem:[%s411 + $0x8] sm:%s403] %v416
                  %v418 = vld [vmem:[%s410 + $0x18] sm:%s403]
                  %419 = vst [vmem:[%s411 + $0xc] sm:%s403] %v418
                $region137: #{tpu_custom_call.1} parent=124 // loop_footer
                  %s409 = sadd.s32 1, %s405
                $region138: #{tpu_custom_call.1} parent=124 // loop_footer_branch
                  %404 = sbr.rel target = $region134
                $region139: #{tpu_custom_call.1} parent=124 // loop_exit
                  _
              $region125: #{tpu_custom_call.1} parent=109 // pred_fallthru
                _
            $region110: #{tpu_custom_call.1} parent=105 // pred_fallthru
              _
            // Predicated region
            $region111: #{tpu_custom_call.1} parent=105 // pred_check
              _
            $region112: #{tpu_custom_call.1} parent=105 // pred_check_branch
              %373 = sbr.rel (0) target = $region114
            $region113: #{tpu_custom_call.1} parent=105 // pred_region
              %s375 = ssub.s32 16, 1
              loop: start=0, step=1, limit=1
              $region115: #{tpu_custom_call.1} parent=113 // loop_pre_header
                _
              $region116: #{tpu_custom_call.1} parent=113 // loop_header
                %s377 = sphi 0, %s381
                %p378 = scmp.ge.s32.totalorder %s377, 1
                %s382 = sphi %s367, %s367
                %s383 = sphi %s365, %s365
              $region117: #{tpu_custom_call.1} parent=113 // loop_header_branch
                %380 = sbr.rel (%p378) target = $region121
              $region118: #{tpu_custom_call.1} parent=113 // loop_body
                %v384 = vld [vmem:[%s382] sm:%s375]
                %385 = vst [vmem:[%s383] sm:%s375] %v384
                %v386 = vld [vmem:[%s382 + $0x8] sm:%s375]
                %387 = vst [vmem:[%s383 + $0x4] sm:%s375] %v386
                %v388 = vld [vmem:[%s382 + $0x10] sm:%s375]
                %389 = vst [vmem:[%s383 + $0x8] sm:%s375] %v388
                %v390 = vld [vmem:[%s382 + $0x18] sm:%s375]
                %391 = vst [vmem:[%s383 + $0xc] sm:%s375] %v390
              $region119: #{tpu_custom_call.1} parent=113 // loop_footer
                %s381 = sadd.s32 1, %s377
              $region120: #{tpu_custom_call.1} parent=113 // loop_footer_branch
                %376 = sbr.rel target = $region116
              $region121: #{tpu_custom_call.1} parent=113 // loop_exit
                _
            $region114: #{tpu_custom_call.1} parent=105 // pred_fallthru
              _
          $region106: #{tpu_custom_call.1} parent=101 // pred_fallthru
            _
          %420 = vnop
        $region102: #{tpu_custom_call.1} parent=15 // pred_fallthru
          _
        // Predicated region
        $region140: #{tpu_custom_call.1} parent=15 // pred_check
          %p421 = pneg %p124
        $region141: #{tpu_custom_call.1} parent=15 // pred_check_branch
          %423 = sbr.rel (%p421) target = $region143
        $region142: #{tpu_custom_call.1} parent=15 // pred_region
          %p424 = scmp.lt.s32.totalorder %s21, 1
          %s425 = scalar_select %p424, %s21, 1
          %s426 = smul.addr %s425, 2
          %s427 = scalar_lea.vmem %s3, %s426
        $region143: #{tpu_custom_call.1} parent=15 // pred_fallthru
          _
        // Predicated region
        $region144: #{tpu_custom_call.1} parent=15 // pred_check
          %p428 = pneg %p150
        $region145: #{tpu_custom_call.1} parent=15 // pred_check_branch
          %430 = sbr.rel (%p428) target = $region147
        $region146: #{tpu_custom_call.1} parent=15 // pred_region
          %p431 = scmp.lt.s32.totalorder %s21, 1
          %s432 = scalar_select %p431, %s21, 1
          %s433 = scalar_lea.vmem %s4, %s432
        $region147: #{tpu_custom_call.1} parent=15 // pred_fallthru
          _
      $region16: #{tpu_custom_call.1} parent=5 // pred_fallthru
        _
      %p434 = scmp.le.s32.totalorder 1, %s14
      %p435 = scmp.lt.s32.totalorder %s14, 9
      %p436 = pnand %p434, %p435
      %p437 = pneg %p436
      // Predicated region
      $region148: #{tpu_custom_call.1} parent=5 // pred_check
        _
      $region149: #{tpu_custom_call.1} parent=5 // pred_check_branch
        %439 = sbr.rel (%p436) target = $region151
      $region150: #{tpu_custom_call.1} parent=5 // pred_region
        %s440 = ssub.s32 %s14, 1
        %s441 = sand.u32 %s39, 1
        %s442 = sand.u32 %s39, 1
        %s443 = smul.addr %s442, 32
        %s444 = scalar_lea.vmem [#allocation2], %s443
        // Predicated region
        $region152: #{tpu_custom_call.1} parent=150 // pred_check
          %p445 = pneg %p52
        $region153: #{tpu_custom_call.1} parent=150 // pred_check_branch
          %447 = sbr.rel (%p445) target = $region155
        $region154: #{tpu_custom_call.1} parent=150 // pred_region
          _
        $region155: #{tpu_custom_call.1} parent=150 // pred_fallthru
          _
        %s448 = sand.u32 %s65, 1
        %s449 = sand.u32 %s65, 1
        %s450 = smul.addr %s449, 32
        %s451 = scalar_lea.vmem [#allocation3], %s450
        // Predicated region
        $region156: #{tpu_custom_call.1} parent=150 // pred_check
          %p452 = pneg %p78
        $region157: #{tpu_custom_call.1} parent=150 // pred_check_branch
          %454 = sbr.rel (%p452) target = $region159
        $region158: #{tpu_custom_call.1} parent=150 // pred_region
          _
        $region159: #{tpu_custom_call.1} parent=150 // pred_fallthru
          _
        %s455 = sand.u32 %s91, 1
        %s456 = sand.u32 %s91, 1
        %s457 = smul.addr %s456, 16
        %s458 = scalar_lea.vmem [#allocation4], %s457
        // Predicated region
        $region160: #{tpu_custom_call.1} parent=150 // pred_check
          %p459 = pneg %p104
        $region161: #{tpu_custom_call.1} parent=150 // pred_check_branch
          %461 = sbr.rel (%p459) target = $region163
        $region162: #{tpu_custom_call.1} parent=150 // pred_region
          _
        $region163: #{tpu_custom_call.1} parent=150 // pred_fallthru
          _
        %s462 = sand.u32 %s39, 1
        %s463 = sand.u32 %s39, 1
        %s464 = smul.addr %s463, 32
        %s465 = scalar_lea.vmem [#allocation2], %s464
        %p466 = pneg %p52
        %p467 = pneg %p49
        %s468 = sand.u32 %s65, 1
        %s469 = sand.u32 %s65, 1
        %s470 = smul.addr %s469, 32
        %s471 = scalar_lea.vmem [#allocation3], %s470
        %p472 = pneg %p78
        %p473 = pneg %p75
        %s474 = sand.u32 %s91, 1
        %s475 = sand.u32 %s91, 1
        %s476 = smul.addr %s475, 16
        %s477 = scalar_lea.vmem [#allocation4], %s476
        %p478 = pneg %p104
        %p479 = pneg %p101
        %p480 = scmp.lt.s32.totalorder %s23, 1
        %s481 = scalar_select %p480, %s23, 1
        %s482 = smul.addr %s481, 2
        %s483 = scalar_lea.vmem %s3, %s482
        %p484 = pneg %p130
        %p485 = pneg %p127
        %p486 = scmp.lt.s32.totalorder %s23, 1
        %s487 = scalar_select %p486, %s23, 1
        %s488 = scalar_lea.vmem %s4, %s487
        %p489 = pneg %p156
        %p490 = pneg %p153
        %p491 = pneg %p182
        %p492 = pneg %p179
        %s493 = sand.u32 %s169, 1
        %s494 = scalar_lea.sflag [#allocation6], %s493
        %s495 = sand.u32 %s169, 1
        %s496 = smul.addr %s495, 2
        %s497 = scalar_lea.vmem [#allocation5], %s496
        %s498 = smul.u32 4, %s24
        %s499 = smul.u32 4, %s24
        %p500 = scmp.lt.s32.totalorder %s23, 1
        %s501 = scalar_select %p500, %s23, 1
        %s502 = smul.addr %s501, 2
        %s503 = scalar_lea.vmem %s3, %s502
        %p504 = scmp.lt.s32.totalorder %s23, 1
        %s505 = scalar_select %p504, %s23, 1
        %s506 = scalar_lea.vmem %s4, %s505
        %p508 = scmp.eq.s32.totalorder %s24, 0
        // Predicated region
        $region164: #{tpu_custom_call.1} parent=150 // pred_check
          %p509 = pneg %p508
        $region165: #{tpu_custom_call.1} parent=150 // pred_check_branch
          %511 = sbr.rel (%p509) target = $region167
        $region166: #{tpu_custom_call.1} parent=150 // pred_region
          %512 = vst [vmem:[%s497] sm:$0x3] 0.0
        $region167: #{tpu_custom_call.1} parent=150 // pred_fallthru
          _
        %v513 = vld [vmem:[%s444] sm:$0xf]
        %v514 = vld [vmem:[%s444 + $0x4] sm:$0xf]
        %v515 = vld [vmem:[%s444 + $0x8] sm:$0xf]
        %v516 = vld [vmem:[%s444 + $0xc] sm:$0xf]
        %v517 = vld [vmem:[%s444 + $0x10] sm:$0xf]
        %v518 = vld [vmem:[%s444 + $0x14] sm:$0xf]
        %v519 = vld [vmem:[%s444 + $0x18] sm:$0xf]
        %v520 = vld [vmem:[%s444 + $0x1c] sm:$0xf]
        %v521 = vld [vmem:[%s458] sm:$0xf]
        %v522 = vld [vmem:[%s458 + $0x4] sm:$0xf]
        %v523 = vld [vmem:[%s458 + $0x8] sm:$0xf]
        %v524 = vld [vmem:[%s458 + $0xc] sm:$0xf]
        %v533 = vunpack.c.l.b16 %v513
        %v534 = vunpack.c.l.b16 %v514
        %v535 = vunpack.c.l.b16 %v515
        %v536 = vunpack.c.l.b16 %v516
        %v537 = vunpack.c.l.b16 %v517
        %v538 = vunpack.c.l.b16 %v518
        %v539 = vunpack.c.l.b16 %v519
        %v540 = vunpack.c.l.b16 %v520
        %v541 = vpack.c.b16 %v534, %v533
        %v542 = vpack.c.b16 %v536, %v535
        %v543 = vpack.c.b16 %v538, %v537
        %v544 = vpack.c.b16 %v540, %v539
        %v549 = vunpack.c.l.b16 %v521
        %v550 = vunpack.c.l.b16 %v522
        %v551 = vunpack.c.l.b16 %v523
        %v552 = vunpack.c.l.b16 %v524
        %v553 = vpack.c.b16 %v550, %v549
        %v554 = vpack.c.b16 %v552, %v551
        %vm557 = vcmask 261120
        %v559 = vsel %vm557, %v541, 0
        %v562 = vsel %vm557, %v542, 0
        %v565 = vsel %vm557, %v543, 0
        %v568 = vsel %vm557, %v544, 0
        %570 = vmatprep.subr.bf16.mxu0 0
        %571 = vmatpush1.bf16.msra.mxu0 0
        %572 = vmatprep.subr.bf16.mxu0 0
        %573 = vmatpush1.bf16.msra.mxu0 0
        %574 = vmatprep.subr.bf16.mxu0 0
        %575 = vmatpush1.bf16.msra.mxu0 0
        %576 = vmatprep.subr.bf16.mxu0 0
        %577 = vmatpush1.bf16.msra.mxu0 0
        %578 = vmatprep.subr.bf16.mxu0 0
        %579 = vmatpush1.bf16.msra.mxu0 0
        %580 = vmatprep.subr.bf16.mxu0 0
        %581 = vmatpush1.bf16.msra.mxu0 0
        %582 = vmatprep.subr.bf16.mxu0 0
        %583 = vmatpush1.bf16.msra.mxu0 %v554
        %584 = vmatprep.subr.bf16.mxu0 0
        %585 = vmatpush1.bf16.msra.mxu0 %v553
        %586 = vmatprep.subr.bf16.mxu0 0
        %587 = vmatpush2.bf16.msra.mxu0 0
        %588 = vmatprep.subr.bf16.mxu0 0
        %589 = vmatpush2.bf16.msra.mxu0 0
        %590 = vmatprep.subr.bf16.mxu0 0
        %591 = vmatpush2.bf16.msra.mxu0 0
        %592 = vmatprep.subr.bf16.mxu0 0
        %593 = vmatpush2.bf16.msra.mxu0 0
        %594 = vmatprep.subr.bf16.mxu0 0
        %595 = vmatpush2.bf16.msra.mxu0 0
        %596 = vmatprep.subr.bf16.mxu0 0
        %597 = vmatpush2.bf16.msra.mxu0 0
        %598 = vmatprep.subr.bf16.mxu0 0
        %599 = vmatpush2.bf16.msra.mxu0 0
        %600 = vmatprep.subr.bf16.mxu0 0
        %601 = vmatpush2.bf16.msra.mxu0 0
        %602 = vmatprep.mubr.bf16.mxu0 0
        %603 = vmatmul.mubr.bf16.gmra.mxu0 %v559
        %v604 = vpop.f32.mrf.mxu0
        %v605 = vadd.f32 0.0, %v604
        %v606 = vpop.f32.mrf.mxu0
        %v607 = vpop.f32.mrf.mxu0
        %v608 = vadd.f32 0.0, %v607
        %v609 = vpop.f32.mrf.mxu0
        %610 = vmatprep.mubr.bf16.mxu0 0
        %611 = vmatmul.mubr.bf16.gmra.mxu0 %v562
        %v612 = vpop.f32.mrf.mxu0
        %v613 = vadd.f32 0.0, %v612
        %v614 = vpop.f32.mrf.mxu0
        %v615 = vpop.f32.mrf.mxu0
        %v616 = vadd.f32 0.0, %v615
        %v617 = vpop.f32.mrf.mxu0
        %618 = vmatprep.mubr.bf16.mxu0 0
        %619 = vmatmul.mubr.bf16.gmra.mxu0 %v565
        %v620 = vpop.f32.mrf.mxu0
        %v621 = vadd.f32 0.0, %v620
        %v622 = vpop.f32.mrf.mxu0
        %v623 = vpop.f32.mrf.mxu0
        %v624 = vadd.f32 0.0, %v623
        %v625 = vpop.f32.mrf.mxu0
        %626 = vmatprep.mubr.bf16.mxu0 0
        %627 = vmatmul.mubr.bf16.gmra.mxu0 %v568
        %v628 = vpop.f32.mrf.mxu0
        %v629 = vadd.f32 0.0, %v628
        %v630 = vpop.f32.mrf.mxu0
        %v631 = vpop.f32.mrf.mxu0
        %v632 = vadd.f32 0.0, %v631
        %v633 = vpop.f32.mrf.mxu0
        %634 = vdwg.mxu0
        %v635 = vld [vmem:[%s451] sm:$0xf]
        %v636 = vld [vmem:[%s451 + $0x4] sm:$0xf]
        %v637 = vld [vmem:[%s451 + $0x8] sm:$0xf]
        %v638 = vld [vmem:[%s451 + $0xc] sm:$0xf]
        %v639 = vld [vmem:[%s451 + $0x10] sm:$0xf]
        %v640 = vld [vmem:[%s451 + $0x14] sm:$0xf]
        %v641 = vld [vmem:[%s451 + $0x18] sm:$0xf]
        %v642 = vld [vmem:[%s451 + $0x1c] sm:$0xf]
        %v643 = vld [vmem:[%s503] sm:$0x3]
        %v652 = vunpack.c.l.b16 %v635
        %v653 = vunpack.c.l.b16 %v636
        %v654 = vunpack.c.l.b16 %v637
        %v655 = vunpack.c.l.b16 %v638
        %v656 = vunpack.c.l.b16 %v639
        %v657 = vunpack.c.l.b16 %v640
        %v658 = vunpack.c.l.b16 %v641
        %v659 = vunpack.c.l.b16 %v642
        %v660 = vpack.c.b16 %v653, %v652
        %v661 = vpack.c.b16 %v655, %v654
        %v662 = vpack.c.b16 %v657, %v656
        %v663 = vpack.c.b16 %v659, %v658
        %vm664 = vcmask 31744
        %v666 = vsel %vm664, %v660, 0
        %v669 = vsel %vm664, %v661, 0
        %v672 = vsel %vm664, %v662, 0
        %v675 = vsel %vm664, %v663, 0
        %vm677 = vcmask 1041408
        %v679 = vsel %vm677, %v643, 0
        %681 = vmatprep.subr.bf16.mxu0 0
        %682 = vmatpush1.bf16.msra.mxu0 0
        %683 = vmatprep.subr.bf16.mxu0 0
        %684 = vmatpush1.bf16.msra.mxu0 0
        %685 = vmatprep.subr.bf16.mxu0 0
        %686 = vmatpush1.bf16.msra.mxu0 0
        %687 = vmatprep.subr.bf16.mxu0 0
        %688 = vmatpush1.bf16.msra.mxu0 0
        %689 = vmatprep.subr.bf16.mxu0 0
        %690 = vmatpush1.bf16.msra.mxu0 0
        %691 = vmatprep.subr.bf16.mxu0 0
        %692 = vmatpush1.bf16.msra.mxu0 0
        %693 = vmatprep.subr.bf16.mxu0 0
        %694 = vmatpush1.bf16.msra.mxu0 0
        %695 = vmatprep.subr.bf16.mxu0 0
        %696 = vmatpush1.bf16.msra.mxu0 %v679
        %697 = vmatprep.subr.bf16.mxu0 0
        %698 = vmatpush2.bf16.msra.mxu0 0
        %699 = vmatprep.subr.bf16.mxu0 0
        %700 = vmatpush2.bf16.msra.mxu0 0
        %701 = vmatprep.subr.bf16.mxu0 0
        %702 = vmatpush2.bf16.msra.mxu0 0
        %703 = vmatprep.subr.bf16.mxu0 0
        %704 = vmatpush2.bf16.msra.mxu0 0
        %705 = vmatprep.subr.bf16.mxu0 0
        %706 = vmatpush2.bf16.msra.mxu0 0
        %707 = vmatprep.subr.bf16.mxu0 0
        %708 = vmatpush2.bf16.msra.mxu0 0
        %709 = vmatprep.subr.bf16.mxu0 0
        %710 = vmatpush2.bf16.msra.mxu0 0
        %711 = vmatprep.subr.bf16.mxu0 0
        %712 = vmatpush2.bf16.msra.mxu0 0
        %713 = vmatprep.mubr.bf16.mxu0 0
        %714 = vmatmul.mubr.bf16.gmra.mxu0 %v666
        %v715 = vpop.f32.mrf.mxu0
        %v716 = vadd.f32 0.0, %v715
        %v717 = vpop.f32.mrf.mxu0
        %v718 = vpop.f32.mrf.mxu0
        %v719 = vadd.f32 0.0, %v718
        %v720 = vpop.f32.mrf.mxu0
        %721 = vmatprep.mubr.bf16.mxu0 0
        %722 = vmatmul.mubr.bf16.gmra.mxu0 %v669
        %v723 = vpop.f32.mrf.mxu0
        %v724 = vadd.f32 0.0, %v723
        %v725 = vpop.f32.mrf.mxu0
        %v726 = vpop.f32.mrf.mxu0
        %v727 = vadd.f32 0.0, %v726
        %v728 = vpop.f32.mrf.mxu0
        %729 = vmatprep.mubr.bf16.mxu0 0
        %730 = vmatmul.mubr.bf16.gmra.mxu0 %v672
        %v731 = vpop.f32.mrf.mxu0
        %v732 = vadd.f32 0.0, %v731
        %v733 = vpop.f32.mrf.mxu0
        %v734 = vpop.f32.mrf.mxu0
        %v735 = vadd.f32 0.0, %v734
        %v736 = vpop.f32.mrf.mxu0
        %737 = vmatprep.mubr.bf16.mxu0 0
        %738 = vmatmul.mubr.bf16.gmra.mxu0 %v675
        %v739 = vpop.f32.mrf.mxu0
        %v740 = vadd.f32 0.0, %v739
        %v741 = vpop.f32.mrf.mxu0
        %v742 = vpop.f32.mrf.mxu0
        %v743 = vadd.f32 0.0, %v742
        %v744 = vpop.f32.mrf.mxu0
        %745 = vdwg.mxu0
        %v746 = vmul.f32 %v605, %v716
        %v747 = vmul.f32 %v608, %v719
        %v748 = vmul.f32 %v613, %v724
        %v749 = vmul.f32 %v616, %v727
        %v750 = vmul.f32 %v621, %v732
        %v751 = vmul.f32 %v624, %v735
        %v752 = vmul.f32 %v629, %v740
        %v753 = vmul.f32 %v632, %v743
        %v754 = vld [vmem:[%s506] sm:$0x1]
        %v756 = vlaneseq
        %v757 = vshrl.u32 %v756, 7
        %v758 = vsub.s32 0, %v757
        %v759 = vrot.slane %v754, %v758
        %v761 = vadd.f32 %v746, %v759
        %v762 = vadd.f32 %v747, %v759
        %v763 = vadd.f32 %v748, %v759
        %v764 = vadd.f32 %v749, %v759
        %v765 = vadd.f32 %v750, %v759
        %v766 = vadd.f32 %v751, %v759
        %v767 = vadd.f32 %v752, %v759
        %v768 = vadd.f32 %v753, %v759
        %v769 = vmax.f32 %v761, 1e-06
        %v770 = vmax.f32 %v762, 1e-06
        %v771 = vmax.f32 %v763, 1e-06
        %v772 = vmax.f32 %v764, 1e-06
        %v773 = vmax.f32 %v765, 1e-06
        %v774 = vmax.f32 %v766, 1e-06
        %v775 = vmax.f32 %v767, 1e-06
        %v776 = vmax.f32 %v768, 1e-06
        %v777 = vmul.f32 %v769, %v769
        %v778 = vmul.f32 %v770, %v770
        %v779 = vmul.f32 %v771, %v771
        %v780 = vmul.f32 %v772, %v772
        %v781 = vmul.f32 %v773, %v773
        %v782 = vmul.f32 %v774, %v774
        %v783 = vmul.f32 %v775, %v775
        %v784 = vmul.f32 %v776, %v776
        %v785 = vmul.f32 %v777, %v769
        %v786 = vmul.f32 %v778, %v770
        %v787 = vmul.f32 %v779, %v771
        %v788 = vmul.f32 %v780, %v772
        %v789 = vmul.f32 %v781, %v773
        %v790 = vmul.f32 %v782, %v774
        %v791 = vmul.f32 %v783, %v775
        %v792 = vmul.f32 %v784, %v776
        %v793 = vld [vmem:[%s497] sm:$0x3]
        %v794 = vadd.f32 %v785, %v786
        %v795 = vadd.f32 %v794, %v787
        %v796 = vadd.f32 %v795, %v788
        %v797 = vrot.slane %v796, 4
        %v798 = vadd.f32 %v796, %v797
        %v799 = vrot.slane %v798, 2
        %v800 = vadd.f32 %v798, %v799
        %v801 = vrot.slane %v800, 1
        %v802 = vadd.f32 %v800, %v801
        %v803 = vadd.f32 %v789, %v790
        %v804 = vadd.f32 %v803, %v791
        %v805 = vadd.f32 %v804, %v792
        %v806 = vrot.slane %v805, 4
        %v807 = vadd.f32 %v805, %v806
        %v808 = vrot.slane %v807, 2
        %v809 = vadd.f32 %v807, %v808
        %v810 = vrot.slane %v809, 1
        %v811 = vadd.f32 %v809, %v810
        %vm814 = vcmask 1041409
        %v815 = vsel %vm814, %v811, %v802
        %v817 = vadd.f32 %v793, %v815
        %818 = vst [vmem:[%s497] sm:$0x3] %v817
        %p819 = scmp.eq.s32.totalorder %s24, 3
        // Predicated region
        $region168: #{tpu_custom_call.1} parent=150 // pred_check
          %p820 = pneg %p819
        $region169: #{tpu_custom_call.1} parent=150 // pred_check_branch
          %822 = sbr.rel (%p820) target = $region171
        $region170: #{tpu_custom_call.1} parent=150 // pred_region
          %v823 = vld [vmem:[%s497] sm:$0x3]
          %v824 = vld [vmem:[%s506] sm:$0x1]
          %v825 = vmax.f32 %v824, 1e-06
          %v826 = vmul.f32 %v825, %v825
          %v827 = vmul.f32 %v826, %v825
          %v828 = vmul.f32 %v827, 28.0
          %v830 = vlaneseq
          %v831 = vshrl.u32 %v830, 7
          %v832 = vsub.s32 0, %v831
          %v833 = vrot.slane %v828, %v832
          %v835 = vsub.f32 %v823, %v833
          %v836 = vmul.f32 %v835, 0.01
          %v837 = vlog2.pop %v836
          %v838 = vmul.f32 %v837, 0.6931472
          %v839 = vmul.f32 %v838, 0.33333334
          %v840 = vmul.f32 %v839, 1.442695
          %v841 = vpow.pop %v840
          %842 = vst [vmem:[%s497] sm:$0x3] %v841
        $region171: #{tpu_custom_call.1} parent=150 // pred_fallthru
          _
        %s843 = sand.u32 %s169, 1
        %s844 = scalar_lea.sflag [#allocation6], %s843
        %s845 = sand.u32 %s169, 1
        %s846 = smul.addr %s845, 2
        %s847 = scalar_lea.vmem [#allocation5], %s846
        // Predicated region
        $region172: #{tpu_custom_call.1} parent=150 // pred_check
          %p848 = pneg %p179
        $region173: #{tpu_custom_call.1} parent=150 // pred_check_branch
          %850 = sbr.rel (%p848) target = $region175
        $region174: #{tpu_custom_call.1} parent=150 // pred_region
          %s852 = ssub.s32 32, 32
          %853 = vsyncadd %s844, %s852
          %s854 = smul.addr %s23, 32
          %s855 = scalar_lea.hbm %s5, %s854
          %s857 = sshll.u32 %s847, 4
          %s858 = int_to_ptr.vmem [resolvable:$true] %s857
          %860 = dma.vmem_to_hbm [thread:$0]  %s858, 32, %s855, %s844
        $region175: #{tpu_custom_call.1} parent=150 // pred_fallthru
          _
      $region151: #{tpu_custom_call.1} parent=5 // pred_fallthru
        _
      %p861 = scmp.le.s32.totalorder 2, %s14
      // Predicated region
      $region176: #{tpu_custom_call.1} parent=5 // pred_check
        %p862 = pneg %p861
      $region177: #{tpu_custom_call.1} parent=5 // pred_check_branch
        %864 = sbr.rel (%p862) target = $region179
      $region178: #{tpu_custom_call.1} parent=5 // pred_region
        %s865 = ssub.s32 %s14, 2
        // Predicated region
        $region180: #{tpu_custom_call.1} parent=178 // pred_check
          %p866 = pneg %p185
        $region181: #{tpu_custom_call.1} parent=178 // pred_check_branch
          %868 = sbr.rel (%p866) target = $region183
        $region182: #{tpu_custom_call.1} parent=178 // pred_region
          %s869 = sand.u32 %s170, 1
          %s870 = scalar_lea.sflag [#allocation6], %s869
          %s871 = sand.u32 %s170, 1
          %s872 = smul.addr %s871, 2
          %s873 = scalar_lea.vmem [#allocation5], %s872
          %874 = dma.done %s870, 32
        $region183: #{tpu_custom_call.1} parent=178 // pred_fallthru
          _
      $region179: #{tpu_custom_call.1} parent=5 // pred_fallthru
        _
    $region6: #{tpu_custom_call.1} parent=1 // loop_footer
      %s18 = sadd.s32 1, %s14
    $region7: #{tpu_custom_call.1} parent=1 // loop_footer_branch
      %13 = sbr.rel target = $region3
    $region8: #{tpu_custom_call.1} parent=1 // loop_exit
      _
    %875 = vsyncpa [#allocation6], 1
    %s876 = scalar_lea.sflag [#allocation6], 1
    %877 = vsyncpa %s876, 1

</llo_original>
